<compile_context>
chip_gen: v6e
topology: v6e:2x2x1
jax: 0.10.0
libtpu: 0.0.40
codegen_flags: <defaults>
</compile_context>

<pallas_src>
import math

import jax
import jax.numpy as jnp
from jax.experimental import pallas as pl
from jax.experimental.pallas import tpu as pltpu


def _round_up(x: int, m: int) -> int:
    return ((x + m - 1) // m) * m


def _sublane_align(dtype) -> int:
    # Minimum sublane tile: 8 for 4-byte, 16 for 2-byte, 32 for 1-byte dtypes.
    return max(8, 32 // jnp.dtype(dtype).itemsize)


def _lane_align(dim: int) -> int:
    # 256-lane tiles fully occupy the 2x256x256 MXU on v6e/v7x; dims <= 128
    # only need a single 128-lane tile (also legal/optimal on v5e).
    return 256 if dim > 128 else 128


def _vmem_limit_bytes() -> int:
    # Budget ~3/4 of physical VMEM (v5e/v6e: 128 MiB -> 96 MiB, v7x: 64 -> 48),
    # capped at 100 MiB, leaving headroom for compiler-internal scratch.
    try:
        cap = int(pltpu.get_tpu_info().vmem_capacity_bytes)
        return min(cap * 3 // 4, 100 * 1024 * 1024)
    except Exception:
        return 48 * 1024 * 1024  # safe on every generation


def _kernel_f32_out(x_ref, w_ref, b_ref, o_ref):
    # f32 output: accumulate directly into the VMEM-resident output block.
    # (Output index_map ignores k, so the block persists across the K axis.)
    k = pl.program_id(2)

    @pl.when(k == 0)
    def _():
        o_ref[...] = jnp.broadcast_to(b_ref[...], o_ref.shape)

    o_ref[...] += jnp.dot(x_ref[...], w_ref[...],
                          preferred_element_type=jnp.float32)


def _kernel_lowp_out(x_ref, w_ref, b_ref, o_ref, acc_ref):
    # Low-precision output: f32 scratch accumulator, cast on the last K step.
    k = pl.program_id(2)

    @pl.when(k == 0)
    def _():
        acc_ref[...] = jnp.broadcast_to(b_ref[...], acc_ref.shape)

    acc_ref[...] += jnp.dot(x_ref[...], w_ref[...],
                            preferred_element_type=jnp.float32)

    @pl.when(k == pl.num_programs(2) - 1)
    def _():
        o_ref[...] = acc_ref[...].astype(o_ref.dtype)


def make_contraction(weight, bias, *, tm=512, tn=512, tk=512, compute_dtype=None):
    """Build forward(x) = x @ weight.T + bias with the weight prepared once.

    weight: [N, K], bias: [N].  `compute_dtype` (e.g. jnp.bfloat16) optionally
    casts the MXU operands; accumulation stays f32 and the output keeps x's
    dtype.
    """
    N, K = weight.shape

    tn_e = min(tn, _round_up(N, _lane_align(N)))
    tk_e = min(tk, _round_up(K, _lane_align(K)))
    Np = _round_up(N, tn_e)
    Kp = _round_up(K, tk_e)

    # One-time [N,K] -> [K,N] transpose + pad (+ cast), cached in the closure;
    # NOT re-materialized on every forward call.
    w_kn = weight.T
    if compute_dtype is not None:
        w_kn = w_kn.astype(compute_dtype)
    if (Kp, Np) != (K, N):
        w_kn = jnp.pad(w_kn, ((0, Kp - K), (0, Np - N)))
    b2d = bias.astype(jnp.float32).reshape(1, N)
    if Np != N:
        b2d = jnp.pad(b2d, ((0, 0), (0, Np - N)))

    vmem_limit = _vmem_limit_bytes()

    def forward(x):
        assert x.shape[-1] == K
        out_dtype = x.dtype
        comp_dtype = jnp.dtype(compute_dtype) if compute_dtype is not None else x.dtype

        x2d = x.reshape(-1, K).astype(comp_dtype)
        M = x2d.shape[0]

        sub = max(_sublane_align(comp_dtype), _sublane_align(out_dtype))
        tm_e = min(tm, _round_up(M, sub))
        Mp = _round_up(M, tm_e)
        # If the whole problem fits a single (i, j) tile, split M into two
        # blocks so both TensorCores on v7x get work.
        if Mp // tm_e == 1 and Np // tn_e == 1 and tm_e >= 2 * sub:
            tm_e = _round_up(-(-M // 2), sub)
            Mp = _round_up(M, tm_e)

        if (Mp, Kp) != (M, K):
            x2d = jnp.pad(x2d, ((0, Mp - M), (0, Kp - K)))

        grid = (Mp // tm_e, Np // tn_e, Kp // tk_e)

        if jnp.dtype(out_dtype) == jnp.float32:
            kernel, scratch = _kernel_f32_out, []
        else:
            kernel, scratch = _kernel_lowp_out, [pltpu.VMEM((tm_e, tn_e), jnp.float32)]

        out = pl.pallas_call(
            kernel,
            out_shape=jax.ShapeDtypeStruct((Mp, Np), out_dtype),
            grid_spec=pltpu.PrefetchScalarGridSpec(
                num_scalar_prefetch=0,
                grid=grid,
                in_specs=[
                    pl.BlockSpec((tm_e, tk_e), lambda i, j, k: (i, k)),
                    pl.BlockSpec((tk_e, tn_e), lambda i, j, k: (k, j)),
                    pl.BlockSpec((1, tn_e), lambda i, j, k: (0, j)),
                ],
                out_specs=pl.BlockSpec((tm_e, tn_e), lambda i, j, k: (i, j)),
                scratch_shapes=scratch,
            ),
            compiler_params=pltpu.CompilerParams(
                dimension_semantics=("parallel", "parallel", "arbitrary"),
                vmem_limit_bytes=vmem_limit,
            ),
        )(x2d, w_kn, b2d)

        return out[:M, :N].reshape(*x.shape[:-1], N)

    return forward


def contraction_forward(x, weight, bias, **kwargs):
    """One-shot convenience wrapper (prefer make_contraction for repeated calls)."""
    return make_contraction(weight, bias, **kwargs)(x)


def init_params(key, in_features, out_features, dtype=jnp.float32):
    """Deterministic init mirroring PyTorch's kaiming_uniform_(a=sqrt(5)) +
    uniform bias bound = 1/sqrt(fan_in)."""
    kw, kb = jax.random.split(key)
    bound = 1.0 / math.sqrt(in_features)
    weight = jax.random.uniform(
        kw, (out_features, in_features), dtype=dtype, minval=-bound, maxval=bound)
    bias = jax.random.uniform(
        kb, (out_features,), dtype=dtype, minval=-bound, maxval=bound)
    return weight, bias


if __name__ == "__main__":
    key = jax.random.PRNGKey(0)
    k_x, k_p = jax.random.split(key)

    batch, seq, in_features, out_features = 2, 8, 32, 32
    x = jax.random.normal(k_x, (batch, seq, in_features), dtype=jnp.float32)
    weight, bias = init_params(k_p, in_features, out_features)

    y_ref = jnp.matmul(x, weight.T) + bias

    # f32 path (direct-accumulate kernel) — exact-tolerance check.
    forward = make_contraction(weight, bias)
    y = jax.block_until_ready(forward(x))
    assert y.shape == (batch, seq, out_features)
    assert jnp.allclose(y, y_ref, atol=1e-5, rtol=1e-5)

    # bf16-operand path (MXU-native, f32 accumulation, scratch kernel) —
    # looser tolerance due to bf16 operand quantization.
    x_bf = x.astype(jnp.bfloat16)
    forward_bf = make_contraction(weight, bias, compute_dtype=jnp.bfloat16)
    y_bf = jax.block_until_ready(forward_bf(x_bf))
    assert y_bf.shape == (batch, seq, out_features)
    assert jnp.allclose(y_bf.astype(jnp.float32), y_ref, atol=5e-2, rtol=5e-2)

    print("KERNEL_OK")
</pallas_src>

<mosaic_0001>
module attributes {stable_mosaic.version = 11 : i64} {
  func.func @_kernel_f32_out(%arg0: i32, %arg1: i32, %arg2: i32, %arg3: memref<8x128xf32, #tpu.memory_space<vmem>>, %arg4: memref<128x128xf32, #tpu.memory_space<vmem>>, %arg5: memref<1x128xf32, #tpu.memory_space<vmem>>, %arg6: memref<8x128xf32, #tpu.memory_space<vmem>>) attributes {dimension_semantics = [#tpu.dimension_semantics<parallel>, #tpu.dimension_semantics<parallel>, #tpu.dimension_semantics<arbitrary>], iteration_bounds = array<i64: 2, 1, 1>, scalar_prefetch = 0 : i64, scratch_operands = 0 : i64, tpu.core_type = #tpu.core_type<tc>, window_params = [{transform_indices = @transform_0, window_bounds = array<i64: 8, 128>}, {transform_indices = @transform_1, window_bounds = array<i64: 128, 128>}, {transform_indices = @transform_2, window_bounds = array<i64: 1, 128>}, {transform_indices = @transform_3, window_bounds = array<i64: 8, 128>}]} {
    %c0_i32 = arith.constant 0 : i32
    %0 = arith.cmpi eq, %arg2, %c0_i32 : i32
    %1 = arith.extui %0 : i1 to i32
    %c0_i32_0 = arith.constant 0 : i32
    %2 = arith.cmpi ne, %1, %c0_i32_0 : i32
    scf.if %2 {
      %c0_8 = arith.constant 0 : index
      %c0_9 = arith.constant 0 : index
      %9 = vector.load %arg5[%c0_8, %c0_9] : memref<1x128xf32, #tpu.memory_space<vmem>>, vector<1x128xf32>
      %10 = vector.shape_cast %9 : vector<1x128xf32> to vector<1x128xf32>
      %11 = vector.broadcast %10 : vector<1x128xf32> to vector<8x128xf32>
      %c0_10 = arith.constant 0 : index
      %c0_11 = arith.constant 0 : index
      %12 = vector.load %arg6[%c0_10, %c0_11] : memref<8x128xf32, #tpu.memory_space<vmem>>, vector<8x128xf32>
      tpu.vector_store %arg6[%c0_10, %c0_11], %11 {strides = array<i32>} : memref<8x128xf32, #tpu.memory_space<vmem>>, vector<8x128xf32>,
    } else {
    }
    %c0 = arith.constant 0 : index
    %c0_1 = arith.constant 0 : index
    %3 = vector.load %arg6[%c0, %c0_1] : memref<8x128xf32, #tpu.memory_space<vmem>>, vector<8x128xf32>
    %c0_2 = arith.constant 0 : index
    %c0_3 = arith.constant 0 : index
    %4 = vector.load %arg3[%c0_2, %c0_3] : memref<8x128xf32, #tpu.memory_space<vmem>>, vector<8x128xf32>
    %c0_4 = arith.constant 0 : index
    %c0_5 = arith.constant 0 : index
    %5 = vector.load %arg4[%c0_4, %c0_5] : memref<128x128xf32, #tpu.memory_space<vmem>>, vector<128x128xf32>
    %cst = arith.constant dense<0.000000e+00> : vector<8x128xf32>
    %6 = tpu.matmul %4, %5, %cst {dimension_numbers = #tpu.dot_dimension_numbers<[1], [0], [0], [1], [0, 0, 1, 1], [], []>} : vector<8x128xf32>, vector<128x128xf32>, vector<8x128xf32> -> vector<8x128xf32>
    %7 = arith.addf %3, %6 : vector<8x128xf32>
    %c0_6 = arith.constant 0 : index
    %c0_7 = arith.constant 0 : index
    %8 = vector.load %arg6[%c0_6, %c0_7] : memref<8x128xf32, #tpu.memory_space<vmem>>, vector<8x128xf32>
    tpu.vector_store %arg6[%c0_6, %c0_7], %7 {strides = array<i32>} : memref<8x128xf32, #tpu.memory_space<vmem>>, vector<8x128xf32>,
    return
  }
  func.func @transform_0(%arg0: i32, %arg1: i32, %arg2: i32) -> (i32, i32) {
    %c0_i32 = arith.constant 0 : i32
    return %arg0, %arg2 : i32, i32
  }
  func.func @transform_1(%arg0: i32, %arg1: i32, %arg2: i32) -> (i32, i32) {
    %c0_i32 = arith.constant 0 : i32
    return %arg2, %arg1 : i32, i32
  }
  func.func @transform_2(%arg0: i32, %arg1: i32, %arg2: i32) -> (i32, i32) {
    %c0_i32 = arith.constant 0 : i32
    %c0_i32_0 = arith.constant 0 : i32
    return %c0_i32, %arg1 : i32, i32
  }
  func.func @transform_3(%arg0: i32, %arg1: i32, %arg2: i32) -> (i32, i32) {
    %c0_i32 = arith.constant 0 : i32
    return %arg0, %arg1 : i32, i32
  }
}

</mosaic_0001>

<llo_original>
// kernel: tpu_custom_call.1
$region0: #{tpu_custom_call.1}
  #allocation0 [shape = 'u32[]', space=smem, size = 0x4, offset = 0x4, fixed_abs, tag = 'smem constant byte address 0x4 - core index']
  #allocation1 [shape = 'u32[144,128]{1,0:T(1,128)}', space=vmem, size = 0x12000, scoped, tag = 'internal scratch']
  %s0 = inlined_call_operand.hbm [shape: f32[16,128], index: 0, kind: input, shape index: {}]
  %s1 = inlined_call_operand.hbm [shape: f32[128,128], index: 1, kind: input, shape index: {}]
  %s2 = inlined_call_operand.vmem [shape: f32[1,128], index: 2, kind: input, shape index: {}]
  %s3 = inlined_call_operand.hbm [shape: f32[16,128], index: 3, kind: output, shape index: {}]
  %s4 = sld [smem:[#allocation0]]
  $region57: #{tpu_custom_call.1} parent=0
    _
  %s6 = ssub.s32 1, %s4
  %s7 = scalar_select 0, %s6, %s4
  $region1: #{tpu_custom_call.1} parent=0
    #allocation2 [shape = 'u8[8192]{0}', space=vmem, size = 0x2000, scoped, tag = 'input window, operand 0']
    #allocation3 [shape = 's32[2]{0}', space=sflag, size = 0x8, scoped, tag = 'scoped memory for tpu_custom_call.1']
    #allocation4 [shape = 's32[2]{0}', space=sflag, size = 0x8, scoped, tag = 'scoped memory for tpu_custom_call.1']
    #allocation5 [shape = 'u8[65536]{0}', space=vmem, size = 0x10000, scoped, tag = 'input window, operand 1, single buffered']
    #allocation6 [shape = 's32[1]{0}', space=sflag, size = 0x4, scoped, tag = 'scoped memory for tpu_custom_call.1']
    #allocation7 [shape = 'u8[8192]{0}', space=vmem, size = 0x2000, scoped, tag = 'output window, operand 0']
    %8 = vsyncpa [#allocation3], 0
    %s9 = scalar_lea.sflag [#allocation3], 1
    %10 = vsyncpa %s9, 0
    %11 = vsyncpa [#allocation6], 0
    %12 = vsyncpa [#allocation4], 0
    %s13 = scalar_lea.sflag [#allocation4], 1
    %14 = vsyncpa %s13, 0
    loop: start=0, step=1, limit=4
    $region2: #{tpu_custom_call.1} parent=1 // loop_pre_header
      _
    $region3: #{tpu_custom_call.1} parent=1 // loop_header
      %s16 = sphi 0, %s20
      %p17 = scmp.ge.s32.totalorder %s16, 4
      %s23 = sphi 0, %s42
      %s24 = sphi 0, %s38
      %s25 = sphi 0, %s34
      %s26 = sphi 0, %s23
      %s27 = sphi 0, %s24
      %s28 = sphi 0, %s25
      %s29 = sphi 0, %s26
      %s30 = sphi 0, %s27
      %s31 = sphi 0, %s28
      %s47 = sphi 0, %s49
      %s50 = sphi 0, %s47
      %s51 = sphi 0, %s50
      %s67 = sphi 0, %s51
      %s75 = sphi 0, %s77
      %s78 = sphi 0, %s75
      %s79 = sphi 0, %s78
      %s95 = sphi 0, %s79
      %s101 = sphi 0, %s103
      %s104 = sphi 0, %s101
      %s105 = sphi 0, %s104
      %s121 = sphi 0, %s105
      %s129 = sphi 0, %s131
      %s132 = sphi 0, %s129
      %s133 = sphi 0, %s132
      %s149 = sphi 0, %s133
    $region4: #{tpu_custom_call.1} parent=1 // loop_header_branch
      %19 = sbr.rel (%p17) target = $region8
    $region5: #{tpu_custom_call.1} parent=1 // loop_body
      %s21 = ssub.s32 %s16, 1
      %s22 = ssub.s32 %s16, 2
      %s32 = sadd.s32 1, %s25
      %p33 = scmp.ge.s32.totalorder %s32, 1
      %s34 = scalar_select %p33, 0, %s32
      %s35 = sadd.s32 1, %s24
      %s36 = scalar_select %p33, %s35, %s24
      %p37 = scmp.ge.s32.totalorder %s36, 1
      %s38 = scalar_select %p37, 0, %s36
      %s39 = sadd.s32 1, %s23
      %s40 = scalar_select %p37, %s39, %s23
      %p41 = scmp.ge.s32.totalorder %s40, 2
      %s42 = scalar_select %p41, 0, %s40
      %s43 = ssub.s32 %s23, %s42
      %s44 = ssub.s32 %s25, %s34
      %s45 = sor.u32 %s43, %s44
      %p46 = scmp.eq.s32.totalorder %s45, 0
      %s48 = sadd.s32 %s47, 1
      %s49 = scalar_select %p46, %s47, %s48
      %p52 = pneg %p46
      %p53 = scmp.eq.s32.totalorder %s16, 1
      %p54 = por %p52, %p53
      %p55 = scmp.ne.s32.totalorder %s47, %s50
      %p56 = scmp.eq.s32.totalorder %s16, 0
      %p57 = por %p55, %p56
      %p58 = scmp.ne.s32.totalorder %s47, %s50
      %p59 = scmp.eq.s32.totalorder %s21, 1
      %p60 = por %p58, %p59
      %p61 = scmp.ne.s32.totalorder %s50, %s51
      %p62 = scmp.eq.s32.totalorder %s21, 0
      %p63 = por %p61, %p62
      %p64 = scmp.ne.s32.totalorder %s50, %s51
      %p65 = scmp.eq.s32.totalorder %s22, 1
      %p66 = por %p64, %p65
      %p68 = scmp.ne.s32.totalorder %s51, %s67
      %p69 = scmp.eq.s32.totalorder %s22, 0
      %p70 = por %p68, %p69
      %s71 = ssub.s32 %s25, %s34
      %s72 = ssub.s32 %s24, %s38
      %s73 = sor.u32 %s71, %s72
      %p74 = scmp.eq.s32.totalorder %s73, 0
      %s76 = sadd.s32 %s75, 1
      %s77 = scalar_select %p74, %s75, %s76
      %p80 = pneg %p74
      %p81 = scmp.eq.s32.totalorder %s16, 1
      %p82 = por %p80, %p81
      %p83 = scmp.ne.s32.totalorder %s75, %s78
      %p84 = scmp.eq.s32.totalorder %s16, 0
      %p85 = por %p83, %p84
      %p86 = scmp.ne.s32.totalorder %s75, %s78
      %p87 = scmp.eq.s32.totalorder %s21, 1
      %p88 = por %p86, %p87
      %p89 = scmp.ne.s32.totalorder %s78, %s79
      %p90 = scmp.eq.s32.totalorder %s21, 0
      %p91 = por %p89, %p90
      %p92 = scmp.ne.s32.totalorder %s78, %s79
      %p93 = scmp.eq.s32.totalorder %s22, 1
      %p94 = por %p92, %p93
      %p96 = scmp.ne.s32.totalorder %s79, %s95
      %p97 = scmp.eq.s32.totalorder %s22, 0
      %p98 = por %p96, %p97
      %s99 = ssub.s32 %s24, %s38
      %p100 = scmp.eq.s32.totalorder %s99, 0
      %s102 = sadd.s32 %s101, 1
      %s103 = scalar_select %p100, %s101, %s102
      %p106 = pneg %p100
      %p107 = scmp.eq.s32.totalorder %s16, 1
      %p108 = por %p106, %p107
      %p109 = scmp.ne.s32.totalorder %s101, %s104
      %p110 = scmp.eq.s32.totalorder %s16, 0
      %p111 = por %p109, %p110
      %p112 = scmp.ne.s32.totalorder %s101, %s104
      %p113 = scmp.eq.s32.totalorder %s21, 1
      %p114 = por %p112, %p113
      %p115 = scmp.ne.s32.totalorder %s104, %s105
      %p116 = scmp.eq.s32.totalorder %s21, 0
      %p117 = por %p115, %p116
      %p118 = scmp.ne.s32.totalorder %s104, %s105
      %p119 = scmp.eq.s32.totalorder %s22, 1
      %p120 = por %p118, %p119
      %p122 = scmp.ne.s32.totalorder %s105, %s121
      %p123 = scmp.eq.s32.totalorder %s22, 0
      %p124 = por %p122, %p123
      %s125 = ssub.s32 %s23, %s42
      %s126 = ssub.s32 %s24, %s38
      %s127 = sor.u32 %s125, %s126
      %p128 = scmp.eq.s32.totalorder %s127, 0
      %s130 = sadd.s32 %s129, 1
      %s131 = scalar_select %p128, %s129, %s130
      %p134 = pneg %p128
      %p135 = scmp.eq.s32.totalorder %s16, 1
      %p136 = por %p134, %p135
      %p137 = scmp.ne.s32.totalorder %s129, %s132
      %p138 = scmp.eq.s32.totalorder %s16, 0
      %p139 = por %p137, %p138
      %p140 = scmp.ne.s32.totalorder %s129, %s132
      %p141 = scmp.eq.s32.totalorder %s21, 1
      %p142 = por %p140, %p141
      %p143 = scmp.ne.s32.totalorder %s132, %s133
      %p144 = scmp.eq.s32.totalorder %s21, 0
      %p145 = por %p143, %p144
      %p146 = scmp.ne.s32.totalorder %s132, %s133
      %p147 = scmp.eq.s32.totalorder %s22, 1
      %p148 = por %p146, %p147
      %p150 = scmp.ne.s32.totalorder %s133, %s149
      %p151 = scmp.eq.s32.totalorder %s22, 0
      %p152 = por %p150, %p151
      %p153 = scmp.le.s32.totalorder 1, %s16
      %p154 = scmp.lt.s32.totalorder %s16, 3
      %p155 = pnand %p153, %p154
      %p156 = pneg %p155
      // Predicated region
      $region9: #{tpu_custom_call.1} parent=5 // pred_check
        _
      $region10: #{tpu_custom_call.1} parent=5 // pred_check_branch
        %158 = sbr.rel (%p155) target = $region12
      $region11: #{tpu_custom_call.1} parent=5 // pred_region
        %s159 = ssub.s32 %s16, 1
        // Predicated region
        $region13: #{tpu_custom_call.1} parent=11 // pred_check
          %p160 = pneg %p91
        $region14: #{tpu_custom_call.1} parent=11 // pred_check_branch
          %162 = sbr.rel (%p160) target = $region16
        $region15: #{tpu_custom_call.1} parent=11 // pred_region
          %s163 = smul.u32 16, %s28
          %s165 = ssub.s32 2048, 2048
          %166 = vsyncadd [#allocation6], %s165
          %s167 = sadd.s32 %s27, %s163
          %s168 = smul.addr %s167, 128
          %s169 = scalar_lea.hbm %s1, %s168
          %s170 = sshll.u32 [#allocation5], 4
          %s171 = int_to_ptr.vmem [resolvable:$true] %s170
          %176 = dma.hbm_to_vmem [thread:$0]  %s169, 2048, %s171, [#allocation6], 128, 128, 8
        $region16: #{tpu_custom_call.1} parent=11 // pred_fallthru
          _
        // Predicated region
        $region17: #{tpu_custom_call.1} parent=11 // pred_check
          %p177 = pneg %p117
        $region18: #{tpu_custom_call.1} parent=11 // pred_check_branch
          %179 = sbr.rel (%p177) target = $region20
        $region19: #{tpu_custom_call.1} parent=11 // pred_region
          %p180 = scmp.lt.s32.totalorder %s27, 0
          %s181 = scalar_select %p180, %s27, 0
          %s182 = scalar_lea.vmem %s2, %s181
        $region20: #{tpu_custom_call.1} parent=11 // pred_fallthru
          _
      $region12: #{tpu_custom_call.1} parent=5 // pred_fallthru
        _
      %p183 = scmp.lt.s32.totalorder %s16, 2
      // Predicated region
      $region21: #{tpu_custom_call.1} parent=5 // pred_check
        %p184 = pneg %p183
      $region22: #{tpu_custom_call.1} parent=5 // pred_check_branch
        %186 = sbr.rel (%p184) target = $region24
      $region23: #{tpu_custom_call.1} parent=5 // pred_region
        // Predicated region
        $region25: #{tpu_custom_call.1} parent=23 // pred_check
          %p187 = pneg %p57
        $region26: #{tpu_custom_call.1} parent=23 // pred_check_branch
          %189 = sbr.rel (%p187) target = $region28
        $region27: #{tpu_custom_call.1} parent=23 // pred_region
          %s190 = sand.u32 %s47, 1
          %s191 = scalar_lea.sflag [#allocation3], %s190
          %s192 = sand.u32 %s47, 1
          %s193 = smul.addr %s192, 8
          %s194 = scalar_lea.vmem [#allocation2], %s193
          %s196 = ssub.s32 128, 128
          %197 = vsyncadd %s191, %s196
          %s198 = sadd.s32 %s25, %s23
          %s199 = smul.addr %s198, 128
          %s200 = scalar_lea.hbm %s0, %s199
          %s202 = sshll.u32 %s194, 4
          %s203 = int_to_ptr.vmem [resolvable:$true] %s202
          %205 = dma.hbm_to_vmem [thread:$0]  %s200, 128, %s203, %s191
        $region28: #{tpu_custom_call.1} parent=23 // pred_fallthru
          _
      $region24: #{tpu_custom_call.1} parent=5 // pred_fallthru
        _
      %p206 = scmp.le.s32.totalorder 1, %s16
      %p207 = scmp.lt.s32.totalorder %s16, 3
      %p208 = pnand %p206, %p207
      %p209 = pneg %p208
      // Predicated region
      $region29: #{tpu_custom_call.1} parent=5 // pred_check
        _
      $region30: #{tpu_custom_call.1} parent=5 // pred_check_branch
        %211 = sbr.rel (%p208) target = $region32
      $region31: #{tpu_custom_call.1} parent=5 // pred_region
        %s212 = ssub.s32 %s16, 1
        %s213 = sand.u32 %s50, 1
        %s214 = scalar_lea.sflag [#allocation3], %s213
        %s215 = sand.u32 %s50, 1
        %s216 = smul.addr %s215, 8
        %s217 = scalar_lea.vmem [#allocation2], %s216
        // Predicated region
        $region33: #{tpu_custom_call.1} parent=31 // pred_check
          %p218 = pneg %p63
        $region34: #{tpu_custom_call.1} parent=31 // pred_check_branch
          %220 = sbr.rel (%p218) target = $region36
        $region35: #{tpu_custom_call.1} parent=31 // pred_region
          %221 = dma.done %s214, 128
        $region36: #{tpu_custom_call.1} parent=31 // pred_fallthru
          _
        // Predicated region
        $region37: #{tpu_custom_call.1} parent=31 // pred_check
          %p222 = pneg %p91
        $region38: #{tpu_custom_call.1} parent=31 // pred_check_branch
          %224 = sbr.rel (%p222) target = $region40
        $region39: #{tpu_custom_call.1} parent=31 // pred_region
          %225 = dma.done [#allocation6], 2048
        $region40: #{tpu_custom_call.1} parent=31 // pred_fallthru
          _
        %s226 = sand.u32 %s50, 1
        %s227 = scalar_lea.sflag [#allocation3], %s226
        %s228 = sand.u32 %s50, 1
        %s229 = smul.addr %s228, 8
        %s230 = scalar_lea.vmem [#allocation2], %s229
        %p231 = pneg %p63
        %p232 = pneg %p60
        %p233 = pneg %p91
        %p234 = pneg %p88
        %p235 = scmp.lt.s32.totalorder %s27, 0
        %s236 = scalar_select %p235, %s27, 0
        %s237 = scalar_lea.vmem %s2, %s236
        %p238 = pneg %p117
        %p239 = pneg %p114
        %p240 = pneg %p145
        %p241 = pneg %p142
        %s242 = sand.u32 %s132, 1
        %s243 = scalar_lea.sflag [#allocation4], %s242
        %s244 = sand.u32 %s132, 1
        %s245 = smul.addr %s244, 8
        %s246 = scalar_lea.vmem [#allocation7], %s245
        %s247 = smul.u32 16, %s28
        %p248 = scmp.lt.s32.totalorder %s27, 0
        %s249 = scalar_select %p248, %s27, 0
        %s250 = scalar_lea.vmem %s2, %s249
        %p251 = scmp.eq.s32.totalorder %s28, 0
        // Predicated region
        $region41: #{tpu_custom_call.1} parent=31 // pred_check
          %p252 = pneg %p251
        $region42: #{tpu_custom_call.1} parent=31 // pred_check_branch
          %254 = sbr.rel (%p252) target = $region44
        $region43: #{tpu_custom_call.1} parent=31 // pred_region
          %v255 = vld [vmem:[%s250] sm:$0x1]
          %v257 = vlaneseq
          %v258 = vshrl.u32 %v257, 7
          %v259 = vsub.s32 0, %v258
          %v260 = vrot.slane %v255, %v259
          %262 = vst [vmem:[%s246] sm:$0xff] %v260
        $region44: #{tpu_custom_call.1} parent=31 // pred_fallthru
          _
        %v263 = vld [vmem:[%s246] sm:$0xff]
        %v264 = vld [vmem:[%s217] sm:$0xff]
        %v265 = vld [vmem:[#allocation5] sm:$0xff]
        %v266 = vld [vmem:[#allocation5 + $0x8] sm:$0xff]
        %v267 = vld [vmem:[#allocation5 + $0x10] sm:$0xff]
        %v268 = vld [vmem:[#allocation5 + $0x18] sm:$0xff]
        %v269 = vld [vmem:[#allocation5 + $0x20] sm:$0xff]
        %v270 = vld [vmem:[#allocation5 + $0x28] sm:$0xff]
        %v271 = vld [vmem:[#allocation5 + $0x30] sm:$0xff]
        %v272 = vld [vmem:[#allocation5 + $0x38] sm:$0xff]
        %v273 = vld [vmem:[#allocation5 + $0x40] sm:$0xff]
        %v274 = vld [vmem:[#allocation5 + $0x48] sm:$0xff]
        %v275 = vld [vmem:[#allocation5 + $0x50] sm:$0xff]
        %v276 = vld [vmem:[#allocation5 + $0x58] sm:$0xff]
        %v277 = vld [vmem:[#allocation5 + $0x60] sm:$0xff]
        %v278 = vld [vmem:[#allocation5 + $0x68] sm:$0xff]
        %v279 = vld [vmem:[#allocation5 + $0x70] sm:$0xff]
        %v280 = vld [vmem:[#allocation5 + $0x78] sm:$0xff]
        %281 = vmatprep.subr.mxu0 0.0
        %282 = vmatpush1.msra.mxu0 %v280
        %283 = vmatprep.subr.mxu0 0.0
        %284 = vmatpush1.msra.mxu0 %v279
        %285 = vmatprep.subr.mxu0 0.0
        %286 = vmatpush1.msra.mxu0 %v278
        %287 = vmatprep.subr.mxu0 0.0
        %288 = vmatpush1.msra.mxu0 %v277
        %289 = vmatprep.subr.mxu0 0.0
        %290 = vmatpush1.msra.mxu0 %v276
        %291 = vmatprep.subr.mxu0 0.0
        %292 = vmatpush1.msra.mxu0 %v275
        %293 = vmatprep.subr.mxu0 0.0
        %294 = vmatpush1.msra.mxu0 %v274
        %295 = vmatprep.subr.mxu0 0.0
        %296 = vmatpush1.msra.mxu0 %v273
        %297 = vmatprep.subr.mxu0 0.0
        %298 = vmatpush1.msra.mxu0 %v272
        %299 = vmatprep.subr.mxu0 0.0
        %300 = vmatpush1.msra.mxu0 %v271
        %301 = vmatprep.subr.mxu0 0.0
        %302 = vmatpush1.msra.mxu0 %v270
        %303 = vmatprep.subr.mxu0 0.0
        %304 = vmatpush1.msra.mxu0 %v269
        %305 = vmatprep.subr.mxu0 0.0
        %306 = vmatpush1.msra.mxu0 %v268
        %307 = vmatprep.subr.mxu0 0.0
        %308 = vmatpush1.msra.mxu0 %v267
        %309 = vmatprep.subr.mxu0 0.0
        %310 = vmatpush1.msra.mxu0 %v266
        %311 = vmatprep.subr.mxu0 0.0
        %312 = vmatpush1.msra.mxu0 %v265
        %313 = vmatprep.subr.mxu0 0.0
        %314 = vmatpush2.msra.mxu0 0.0
        %315 = vmatprep.subr.mxu0 0.0
        %316 = vmatpush2.msra.mxu0 0.0
        %317 = vmatprep.subr.mxu0 0.0
        %318 = vmatpush2.msra.mxu0 0.0
        %319 = vmatprep.subr.mxu0 0.0
        %320 = vmatpush2.msra.mxu0 0.0
        %321 = vmatprep.subr.mxu0 0.0
        %322 = vmatpush2.msra.mxu0 0.0
        %323 = vmatprep.subr.mxu0 0.0
        %324 = vmatpush2.msra.mxu0 0.0
        %325 = vmatprep.subr.mxu0 0.0
        %326 = vmatpush2.msra.mxu0 0.0
        %327 = vmatprep.subr.mxu0 0.0
        %328 = vmatpush2.msra.mxu0 0.0
        %329 = vmatprep.subr.mxu0 0.0
        %330 = vmatpush2.msra.mxu0 0.0
        %331 = vmatprep.subr.mxu0 0.0
        %332 = vmatpush2.msra.mxu0 0.0
        %333 = vmatprep.subr.mxu0 0.0
        %334 = vmatpush2.msra.mxu0 0.0
        %335 = vmatprep.subr.mxu0 0.0
        %336 = vmatpush2.msra.mxu0 0.0
        %337 = vmatprep.subr.mxu0 0.0
        %338 = vmatpush2.msra.mxu0 0.0
        %339 = vmatprep.subr.mxu0 0.0
        %340 = vmatpush2.msra.mxu0 0.0
        %341 = vmatprep.subr.mxu0 0.0
        %342 = vmatpush2.msra.mxu0 0.0
        %343 = vmatprep.subr.mxu0 0.0
        %344 = vmatpush2.msra.mxu0 0.0
        %345 = vmatprep.mubr.f32.mxu0 0.0
        %346 = vmatmul.mubr.f32.gmra.mxu0 %v264
        %v347 = vpop.f32.mrf.mxu0
        %v348 = vadd.f32 0.0, %v347
        %v349 = vpop.f32.mrf.mxu0
        %350 = vdwg.mxu0
        %v351 = vadd.f32 %v263, %v348
        %352 = vst [vmem:[%s246] sm:$0xff] %v351
        %s353 = sand.u32 %s132, 1
        %s354 = scalar_lea.sflag [#allocation4], %s353
        %s355 = sand.u32 %s132, 1
        %s356 = smul.addr %s355, 8
        %s357 = scalar_lea.vmem [#allocation7], %s356
        // Predicated region
        $region45: #{tpu_custom_call.1} parent=31 // pred_check
          %p358 = pneg %p142
        $region46: #{tpu_custom_call.1} parent=31 // pred_check_branch
          %360 = sbr.rel (%p358) target = $region48
        $region47: #{tpu_custom_call.1} parent=31 // pred_region
          %s362 = ssub.s32 128, 128
          %363 = vsyncadd %s354, %s362
          %s364 = sadd.s32 %s27, %s26
          %s365 = smul.addr %s364, 128
          %s366 = scalar_lea.hbm %s3, %s365
          %s368 = sshll.u32 %s357, 4
          %s369 = int_to_ptr.vmem [resolvable:$true] %s368
          %371 = dma.vmem_to_hbm [thread:$0]  %s369, 128, %s366, %s354
        $region48: #{tpu_custom_call.1} parent=31 // pred_fallthru
          _
      $region32: #{tpu_custom_call.1} parent=5 // pred_fallthru
        _
      %p372 = scmp.le.s32.totalorder 2, %s16
      // Predicated region
      $region49: #{tpu_custom_call.1} parent=5 // pred_check
        %p373 = pneg %p372
      $region50: #{tpu_custom_call.1} parent=5 // pred_check_branch
        %375 = sbr.rel (%p373) target = $region52
      $region51: #{tpu_custom_call.1} parent=5 // pred_region
        %s376 = ssub.s32 %s16, 2
        // Predicated region
        $region53: #{tpu_custom_call.1} parent=51 // pred_check
          %p377 = pneg %p148
        $region54: #{tpu_custom_call.1} parent=51 // pred_check_branch
          %379 = sbr.rel (%p377) target = $region56
        $region55: #{tpu_custom_call.1} parent=51 // pred_region
          %s380 = sand.u32 %s133, 1
          %s381 = scalar_lea.sflag [#allocation4], %s380
          %s382 = sand.u32 %s133, 1
          %s383 = smul.addr %s382, 8
          %s384 = scalar_lea.vmem [#allocation7], %s383
          %385 = dma.done %s381, 128
        $region56: #{tpu_custom_call.1} parent=51 // pred_fallthru
          _
      $region52: #{tpu_custom_call.1} parent=5 // pred_fallthru
        _
    $region6: #{tpu_custom_call.1} parent=1 // loop_footer
      %s20 = sadd.s32 1, %s16
    $region7: #{tpu_custom_call.1} parent=1 // loop_footer_branch
      %15 = sbr.rel target = $region3
    $region8: #{tpu_custom_call.1} parent=1 // loop_exit
      _
    %386 = vsyncpa [#allocation3], 1
    %s387 = scalar_lea.sflag [#allocation3], 1
    %388 = vsyncpa %s387, 1
    %389 = vsyncpa [#allocation6], 1
    %390 = vsyncpa [#allocation4], 1
    %s391 = scalar_lea.sflag [#allocation4], 1
    %392 = vsyncpa %s391, 1

</llo_original>
